<compile_context>
chip_gen: v7x
topology: tpu7x:2x2x1
jax: 0.10.0
libtpu: 0.0.40
codegen_flags: <defaults>
</compile_context>

<pallas_src>
import functools
import math

import numpy as np
import jax
import jax.numpy as jnp
from jax import lax
from jax.experimental import pallas as pl
from jax.experimental.pallas import tpu as pltpu

# --------------------------------------------------------------------------
# "args" from the original argparse, fixed deterministically in-script.
# --------------------------------------------------------------------------
ARGS_EPS = 0.3      # args.eps
ARGS_K = 1.0        # args.k_
ARGS_ALPH = 2.0     # args.alph   (must be > 1)
ARGS_LAMBD = 0.0    # args.lambd
ARGS_RHO = 1.0      # args.rho

PGD_ITERS = 200     # deterministic projected-gradient solve (replaces L-BFGS-B)
PGD_LR = 0.02
SAFETY_TOL = 1e-6


def _make_pow_fns(alpha):
    """d**((alpha-1)/alpha) and d**(-1/alpha); sqrt/rsqrt when alpha == 2."""
    p = (alpha - 1.0) / alpha
    if alpha == 2.0:
        return jnp.sqrt, lax.rsqrt
    return (lambda d: jnp.exp(p * jnp.log(d)),
            lambda d: jnp.exp((-1.0 / alpha) * jnp.log(d)))


# --------------------------------------------------------------------------
# Fused kernel: CE losses (per grid step) + (lambda, rho) solve + minLoss
# (on the last grid step, over the resident losses output block).
# --------------------------------------------------------------------------
def _armor_kernel(logits_ref, labels_ref,
                  stats_ref, losses_ref,
                  *, num_tiles, tile_b, n_valid, eps, kappa, alpha):
    i = pl.program_id(0)

    # ---- per-tile cross entropy, lane-dense row [1, tile_b] -----------------
    # logits_ref: (C, tile_b)  classes on sublanes, batch on lanes
    logits = logits_ref[...].astype(jnp.float32)
    labels = labels_ref[...]                                   # (1, tile_b) i32
    m = jnp.max(logits, axis=0, keepdims=True)                 # (1, tile_b)
    lse = m + jnp.log(jnp.sum(jnp.exp(logits - m), axis=0, keepdims=True))
    cls = lax.broadcasted_iota(jnp.int32, logits.shape, 0)     # class index/row
    picked = jnp.sum(jnp.where(cls == labels, logits, 0.0),
                     axis=0, keepdims=True)                    # logits[y[b], b]
    tile_losses = lse - picked                                 # (1, tile_b) f32

    # losses_ref is resident in VMEM across the whole grid (same block index
    # for every step); row i holds samples [i*tile_b, (i+1)*tile_b).
    losses_ref[pl.ds(i, 1), :] = tile_losses

    # ---- last tile: on-device (lambda, rho) solve + minLoss -----------------
    @pl.when(i == num_tiles - 1)
    def _():
        pow_p, pow_ninv = _make_pow_fns(alpha)
        log_alpha = math.log(alpha)            # trace-time constants
        inv_alpha = 1.0 / alpha
        inv_n = 1.0 / n_valid

        L = losses_ref[...]                                    # (num_tiles, tile_b)
        rr = lax.broadcasted_iota(jnp.int32, L.shape, 0)
        cc = lax.broadcasted_iota(jnp.int32, L.shape, 1)
        valid = (rr * tile_b + cc) < n_valid                   # mask padded lanes
        maskf = valid.astype(jnp.float32)
        L_use = jnp.where(valid, L, 0.0)                       # keeps diff > 0

        def red_sum(x):   # full reduce -> (1, 1)
            return jnp.sum(jnp.sum(x, axis=1, keepdims=True), axis=0, keepdims=True)

        def red_max(x):   # full reduce -> (1, 1)
            return jnp.max(jnp.max(x, axis=1, keepdims=True), axis=0, keepdims=True)

        rho_min = red_max(jnp.where(valid, L, -jnp.inf)) + SAFETY_TOL   # (1,1)

        def body(_, carry):
            lam, rho = carry                                   # (1,1) each
            diff = rho - L_use                                 # > 0 everywhere
            a_p = red_sum(maskf * pow_p(diff)) * inv_n         # E[(rho-l)^p]
            a_n = red_sum(maskf * pow_ninv(diff)) * inv_n      # E[(rho-l)^(-1/a)]
            g_lam = (eps - inv_alpha * (log_alpha + 1.0)
                     + inv_alpha * (jnp.log(lam + kappa) + 1.0)
                     - jnp.log(a_p) / (alpha - 1.0))
            g_rho = 1.0 - (lam + kappa) * inv_alpha * a_n / a_p
            g_lam = jnp.clip(g_lam, -5.0, 5.0)
            g_rho = jnp.clip(g_rho, -5.0, 5.0)
            lam = jnp.maximum(lam - PGD_LR * g_lam, 0.0)       # bound lambda >= 0
            rho = jnp.maximum(rho - PGD_LR * g_rho, rho_min)   # bound rho >= rho_min
            return lam, rho

        lam0 = jnp.zeros((1, 1), jnp.float32)                  # lambda_0 = 0
        rho0 = rho_min + 1.0                                   # x0 = rho_min + 1
        lam, rho = lax.fori_loop(0, PGD_ITERS, body, (lam0, rho0))

        lk = lam + kappa
        val = (lam * eps + rho
               - lk * inv_alpha * (log_alpha + 1.0)
               + lk * inv_alpha * jnp.log(lk))
        mean_p = red_sum(maskf * pow_p(rho - L_use)) * inv_n
        min_loss = val - lk / (alpha - 1.0) * jnp.log(mean_p)

        # Pack the three result scalars into one lane-dense [1, 128] row:
        # lane 0 = minLoss, lane 1 = lambda*, lane 2 = rho*.
        lane = lax.broadcasted_iota(jnp.int32, (1, 128), 1)
        stats = jnp.where(lane == 0, min_loss, 0.0)
        stats = jnp.where(lane == 1, lam, stats)
        stats = jnp.where(lane == 2, rho, stats)
        stats_ref[...] = stats


# --------------------------------------------------------------------------
# Wrapper: layout plumbing + single pallas_call, jitted end-to-end.
# --------------------------------------------------------------------------
def _armor_forward(logits, labels):
    B, C = logits.shape
    tile_b = 128 if B <= 1024 else 1024
    num_tiles = (B + tile_b - 1) // tile_b
    b_pad = num_tiles * tile_b

    # Layout plumbing (classes -> sublanes, batch -> lanes); native dtype kept,
    # the f32 cast happens inside the kernel.
    logits_t = jnp.transpose(logits, (1, 0))                   # (C, B)
    labels_i = labels.astype(jnp.int32)
    if b_pad != B:
        logits_t = jnp.pad(logits_t, ((0, 0), (0, b_pad - B)))
        labels_i = jnp.pad(labels_i, (0, b_pad - B))
    labels_2d = labels_i.reshape(1, b_pad)

    kernel = functools.partial(
        _armor_kernel,
        num_tiles=num_tiles, tile_b=tile_b, n_valid=B,
        eps=ARGS_EPS, kappa=ARGS_K, alpha=ARGS_ALPH)

    out_shape = (
        jax.ShapeDtypeStruct((1, 128), jnp.float32),           # [minLoss, lam, rho, ...]
        jax.ShapeDtypeStruct((num_tiles, tile_b), jnp.float32),# per-sample losses
    )
    grid_spec = pltpu.PrefetchScalarGridSpec(
        num_scalar_prefetch=0,
        grid=(num_tiles,),
        in_specs=[
            pl.BlockSpec((C, tile_b), lambda i: (0, i)),       # logits tile
            pl.BlockSpec((1, tile_b), lambda i: (0, i)),       # labels tile
        ],
        out_specs=(
            pl.BlockSpec((1, 128), lambda i: (0, 0)),          # resident stats
            pl.BlockSpec((num_tiles, tile_b), lambda i: (0, 0)),  # resident losses
        ),
    )
    stats, losses = pl.pallas_call(
        kernel,
        out_shape=out_shape,
        grid_spec=grid_spec,
        compiler_params=pltpu.CompilerParams(
            # The grid axis carries resident (revisited) outputs, so it must be
            # "arbitrary".  VMEM use is tiny; the limit leaves ample headroom
            # on v5e/v6e/v7x.
            dimension_semantics=("arbitrary",),
            vmem_limit_bytes=32 * 1024 * 1024),
    )(logits_t, labels_2d)

    min_loss = stats[0, 0]
    lam = stats[0, 1]
    rho = stats[0, 2]
    return min_loss, lam, rho, losses.reshape(-1)[:B]


_armor_forward_jit = jax.jit(_armor_forward)


# --------------------------------------------------------------------------
# armor module (forward pass only)
# --------------------------------------------------------------------------
class ArmorPallas:
    def __init__(self, lambd=ARGS_LAMBD, rho=ARGS_RHO):
        self.lambda_ = lambd
        self.rho_ = rho
        self.losses_ = None

    def forward(self, x_adv_model, y):
        # Single fused launch: CE losses + on-device (lambda, rho) solve + minLoss.
        min_loss, lam, rho, losses = _armor_forward_jit(x_adv_model, y)
        self.lambda_ = lam          # kept on-device (no forced host sync here)
        self.rho_ = rho
        self.losses_ = losses
        # NOTE: the original has a rare (p ~ 2e-5) debug print gated by
        # torch.rand; it does not affect the returned value and is omitted.
        return min_loss


# --------------------------------------------------------------------------
# main
# --------------------------------------------------------------------------
if __name__ == "__main__":
    key = jax.random.PRNGKey(0)
    B, C = 8, 10                                   # small batch, 10 MNIST classes
    kx, ky = jax.random.split(key)
    x_adv_model = jax.random.normal(kx, (B, C), dtype=jnp.float32)  # logits
    y = jax.random.randint(ky, (B,), 0, C, dtype=jnp.int32)         # labels

    model = ArmorPallas()
    min_loss = model.forward(x_adv_model, y)
    min_loss = jax.block_until_ready(min_loss)

    # ---- sanity check against a pure numpy reference ----
    x_np = np.asarray(x_adv_model, dtype=np.float64)
    y_np = np.asarray(y)
    m = x_np.max(axis=1, keepdims=True)
    lse = m[:, 0] + np.log(np.exp(x_np - m).sum(axis=1))
    ref_losses = lse - x_np[np.arange(B), y_np]

    ker_losses = np.asarray(model.losses_, dtype=np.float64)
    assert np.allclose(ker_losses, ref_losses, rtol=1e-5, atol=1e-5)

    # Same deterministic projected-gradient solve as inside the kernel.
    alpha, eps, kap = ARGS_ALPH, ARGS_EPS, ARGS_K
    p = (alpha - 1.0) / alpha
    rho_min = ref_losses.max() + SAFETY_TOL
    lam_r, rho_r = 0.0, rho_min + 1.0
    for _ in range(PGD_ITERS):
        diff = rho_r - ref_losses
        a_p = np.mean(diff ** p)
        a_n = np.mean(diff ** (-1.0 / alpha))
        g_lam = (eps - (np.log(alpha) + 1.0) / alpha
                 + (np.log(lam_r + kap) + 1.0) / alpha
                 - np.log(a_p) / (alpha - 1.0))
        g_rho = 1.0 - (lam_r + kap) / alpha * a_n / a_p
        g_lam = float(np.clip(g_lam, -5.0, 5.0))
        g_rho = float(np.clip(g_rho, -5.0, 5.0))
        lam_r = max(lam_r - PGD_LR * g_lam, 0.0)
        rho_r = max(rho_r - PGD_LR * g_rho, rho_min)
    lk = lam_r + kap
    val = (lam_r * eps + rho_r - lk / alpha * (np.log(alpha) + 1.0)
           + lk / alpha * np.log(lk))
    ref_min = val - lk / (alpha - 1.0) * np.log(np.mean((rho_r - ref_losses) ** p))

    assert np.allclose(float(min_loss), ref_min, rtol=5e-3, atol=5e-3)
    assert np.allclose(float(model.lambda_), lam_r, rtol=5e-3, atol=5e-3)
    assert np.allclose(float(model.rho_), rho_r, rtol=5e-3, atol=5e-3)

    print("KERNEL_OK")
</pallas_src>

<mosaic_0001>
module attributes {stable_mosaic.version = 11 : i64} {
  func.func @_armor_kernel(%arg0: i32, %arg1: memref<10x128xf32, #tpu.memory_space<vmem>>, %arg2: memref<1x128xi32, #tpu.memory_space<vmem>>, %arg3: memref<1x128xf32, #tpu.memory_space<vmem>>, %arg4: memref<1x128xf32, #tpu.memory_space<vmem>>) attributes {dimension_semantics = [#tpu.dimension_semantics<arbitrary>], iteration_bounds = array<i64: 1>, scalar_prefetch = 0 : i64, scratch_operands = 0 : i64, tpu.core_type = #tpu.core_type<tc>, window_params = [{transform_indices = @transform_0, window_bounds = array<i64: 10, 128>}, {transform_indices = @transform_1, window_bounds = array<i64: 1, 128>}, {pipeline_mode = #tpu.pipeline_mode<synchronous>, transform_indices = @transform_2, window_bounds = array<i64: 1, 128>}, {pipeline_mode = #tpu.pipeline_mode<synchronous>, transform_indices = @transform_3, window_bounds = array<i64: 1, 128>}]} {
    %c0 = arith.constant 0 : index
    %c0_0 = arith.constant 0 : index
    %0 = vector.load %arg1[%c0, %c0_0] : memref<10x128xf32, #tpu.memory_space<vmem>>, vector<10x128xf32>
    %c0_1 = arith.constant 0 : index
    %c0_2 = arith.constant 0 : index
    %1 = vector.load %arg2[%c0_1, %c0_2] : memref<1x128xi32, #tpu.memory_space<vmem>>, vector<1x128xi32>
    %cst = arith.constant dense<0xFF800000> : vector<128xf32>
    %2 = vector.multi_reduction <maximumf>, %0, %cst [0] : vector<10x128xf32> to vector<128xf32>
    %3 = vector.shape_cast %2 : vector<128xf32> to vector<1x128xf32>
    %4 = vector.broadcast %3 : vector<1x128xf32> to vector<10x128xf32>
    %5 = arith.subf %0, %4 : vector<10x128xf32>
    %6 = math.exp %5 : vector<10x128xf32>
    %cst_3 = arith.constant dense<0.000000e+00> : vector<128xf32>
    %7 = vector.multi_reduction <add>, %6, %cst_3 [0] : vector<10x128xf32> to vector<128xf32>
    %8 = vector.shape_cast %7 : vector<128xf32> to vector<1x128xf32>
    %9 = math.log %8 : vector<1x128xf32>
    %10 = arith.addf %3, %9 : vector<1x128xf32>
    %11 = tpu.iota {dimensions = array<i32: 0>} : vector<10x128xi32>
    %12 = vector.broadcast %1 : vector<1x128xi32> to vector<10x128xi32>
    %13 = arith.cmpi eq, %11, %12 : vector<10x128xi32>
    %cst_4 = arith.constant 0.000000e+00 : f32
    %14 = vector.broadcast %cst_4 : f32 to vector<10x128xf32>
    %15 = arith.select %13, %0, %14 : vector<10x128xi1>, vector<10x128xf32>
    %cst_5 = arith.constant dense<0.000000e+00> : vector<128xf32>
    %16 = vector.multi_reduction <add>, %15, %cst_5 [0] : vector<10x128xf32> to vector<128xf32>
    %17 = vector.shape_cast %16 : vector<128xf32> to vector<1x128xf32>
    %18 = arith.subf %10, %17 : vector<1x128xf32>
    %19 = arith.index_cast %arg0 : i32 to index
    %c0_6 = arith.constant 0 : index
    %20 = vector.load %arg4[%19, %c0_6] : memref<1x128xf32, #tpu.memory_space<vmem>>, vector<1x128xf32>
    tpu.vector_store %arg4[%19, %c0_6], %18 {strides = array<i32>} : memref<1x128xf32, #tpu.memory_space<vmem>>, vector<1x128xf32>,
    %c0_i32 = arith.constant 0 : i32
    %21 = arith.cmpi eq, %arg0, %c0_i32 : i32
    %22 = arith.extui %21 : i1 to i32
    %c0_i32_7 = arith.constant 0 : i32
    %23 = arith.cmpi ne, %22, %c0_i32_7 : i32
    scf.if %23 {
      %c0_8 = arith.constant 0 : index
      %c0_9 = arith.constant 0 : index
      %24 = vector.load %arg4[%c0_8, %c0_9] : memref<1x128xf32, #tpu.memory_space<vmem>>, vector<1x128xf32>
      %25 = tpu.iota {dimensions = array<i32: 0>} : vector<1x128xi32>
      %26 = tpu.iota {dimensions = array<i32: 1>} : vector<1x128xi32>
      %c128_i32 = arith.constant 128 : i32
      %27 = vector.broadcast %c128_i32 : i32 to vector<1x128xi32>
      %28 = arith.muli %25, %27 : vector<1x128xi32>
      %29 = arith.addi %28, %26 : vector<1x128xi32>
      %c8_i32 = arith.constant 8 : i32
      %30 = vector.broadcast %c8_i32 : i32 to vector<1x128xi32>
      %31 = arith.cmpi slt, %29, %30 : vector<1x128xi32>
      %32 = arith.extui %31 : vector<1x128xi1> to vector<1x128xi32>
      %33 = arith.sitofp %32 : vector<1x128xi32> to vector<1x128xf32>
      %cst_10 = arith.constant 0.000000e+00 : f32
      %34 = vector.broadcast %cst_10 : f32 to vector<1x128xf32>
      %35 = arith.select %31, %24, %34 : vector<1x128xi1>, vector<1x128xf32>
      %cst_11 = arith.constant 0xFF800000 : f32
      %36 = vector.broadcast %cst_11 : f32 to vector<1x128xf32>
      %37 = arith.select %31, %24, %36 : vector<1x128xi1>, vector<1x128xf32>
      %cst_12 = arith.constant dense<0xFF800000> : vector<1xf32>
      %38 = vector.multi_reduction <maximumf>, %37, %cst_12 [1] : vector<1x128xf32> to vector<1xf32>
      %39 = vector.shape_cast %38 : vector<1xf32> to vector<1x1xf32>
      %cst_13 = arith.constant dense<0xFF800000> : vector<1xf32>
      %40 = vector.multi_reduction <maximumf>, %39, %cst_13 [0] : vector<1x1xf32> to vector<1xf32>
      %41 = vector.shape_cast %40 : vector<1xf32> to vector<1x1xf32>
      %cst_14 = arith.constant 9.99999997E-7 : f32
      %42 = vector.broadcast %cst_14 : f32 to vector<1x1xf32>
      %43 = arith.addf %41, %42 : vector<1x1xf32>
      %cst_15 = arith.constant 0.000000e+00 : f32
      %44 = vector.broadcast %cst_15 : f32 to vector<1x1xf32>
      %cst_16 = arith.constant 1.000000e+00 : f32
      %45 = vector.broadcast %cst_16 : f32 to vector<1x1xf32>
      %46 = arith.addf %43, %45 : vector<1x1xf32>
      %c0_i32_17 = arith.constant 0 : i32
      %c200_i32 = arith.constant 200 : i32
      %47 = arith.addi %c0_i32_17, %c200_i32 : i32
      %c1_i32 = arith.constant 1 : i32
      %48:2 = scf.for %arg5 = %c0_i32_17 to %47 step %c1_i32 iter_args(%arg6 = %44, %arg7 = %46) -> (vector<1x1xf32>, vector<1x1xf32>)  : i32 {
        %97 = vector.broadcast %arg7 : vector<1x1xf32> to vector<1x128xf32>
        %98 = arith.subf %97, %35 : vector<1x128xf32>
        %99 = math.sqrt %98 : vector<1x128xf32>
        %100 = arith.mulf %33, %99 : vector<1x128xf32>
        %cst_32 = arith.constant dense<0.000000e+00> : vector<1xf32>
        %101 = vector.multi_reduction <add>, %100, %cst_32 [1] : vector<1x128xf32> to vector<1xf32>
        %102 = vector.shape_cast %101 : vector<1xf32> to vector<1x1xf32>
        %cst_33 = arith.constant dense<0.000000e+00> : vector<1xf32>
        %103 = vector.multi_reduction <add>, %102, %cst_33 [0] : vector<1x1xf32> to vector<1xf32>
        %104 = vector.shape_cast %103 : vector<1xf32> to vector<1x1xf32>
        %cst_34 = arith.constant 1.250000e-01 : f32
        %105 = vector.broadcast %cst_34 : f32 to vector<1x1xf32>
        %106 = arith.mulf %104, %105 : vector<1x1xf32>
        %107 = math.rsqrt %98 : vector<1x128xf32>
        %108 = arith.mulf %33, %107 : vector<1x128xf32>
        %cst_35 = arith.constant dense<0.000000e+00> : vector<1xf32>
        %109 = vector.multi_reduction <add>, %108, %cst_35 [1] : vector<1x128xf32> to vector<1xf32>
        %110 = vector.shape_cast %109 : vector<1xf32> to vector<1x1xf32>
        %cst_36 = arith.constant dense<0.000000e+00> : vector<1xf32>
        %111 = vector.multi_reduction <add>, %110, %cst_36 [0] : vector<1x1xf32> to vector<1xf32>
        %112 = vector.shape_cast %111 : vector<1xf32> to vector<1x1xf32>
        %cst_37 = arith.constant 1.250000e-01 : f32
        %113 = vector.broadcast %cst_37 : f32 to vector<1x1xf32>
        %114 = arith.mulf %112, %113 : vector<1x1xf32>
        %cst_38 = arith.constant 1.000000e+00 : f32
        %115 = vector.broadcast %cst_38 : f32 to vector<1x1xf32>
        %116 = arith.addf %arg6, %115 : vector<1x1xf32>
        %117 = math.log %116 : vector<1x1xf32>
        %cst_39 = arith.constant 1.000000e+00 : f32
        %118 = vector.broadcast %cst_39 : f32 to vector<1x1xf32>
        %119 = arith.addf %117, %118 : vector<1x1xf32>
        %cst_40 = arith.constant 5.000000e-01 : f32
        %120 = vector.broadcast %cst_40 : f32 to vector<1x1xf32>
        %121 = arith.mulf %120, %119 : vector<1x1xf32>
        %cst_41 = arith.constant -0.546573579 : f32
        %122 = vector.broadcast %cst_41 : f32 to vector<1x1xf32>
        %123 = arith.addf %122, %121 : vector<1x1xf32>
        %124 = math.log %106 : vector<1x1xf32>
        %cst_42 = arith.constant 1.000000e+00 : f32
        %125 = vector.broadcast %cst_42 : f32 to vector<1x1xf32>
        %126 = arith.divf %124, %125 : vector<1x1xf32>
        %127 = arith.subf %123, %126 : vector<1x1xf32>
        %cst_43 = arith.constant 1.000000e+00 : f32
        %128 = vector.broadcast %cst_43 : f32 to vector<1x1xf32>
        %129 = arith.addf %arg6, %128 : vector<1x1xf32>
        %cst_44 = arith.constant 5.000000e-01 : f32
        %130 = vector.broadcast %cst_44 : f32 to vector<1x1xf32>
        %131 = arith.mulf %129, %130 : vector<1x1xf32>
        %132 = arith.mulf %131, %114 : vector<1x1xf32>
        %133 = arith.divf %132, %106 : vector<1x1xf32>
        %cst_45 = arith.constant 1.000000e+00 : f32
        %134 = vector.broadcast %cst_45 : f32 to vector<1x1xf32>
        %135 = arith.subf %134, %133 : vector<1x1xf32>
        %cst_46 = arith.constant -5.000000e+00 : f32
        %cst_47 = arith.constant 5.000000e+00 : f32
        %136 = vector.broadcast %cst_46 : f32 to vector<1x1xf32>
        %137 = arith.maximumf %136, %127 : vector<1x1xf32>
        %138 = vector.broadcast %cst_47 : f32 to vector<1x1xf32>
        %139 = arith.minimumf %138, %137 : vector<1x1xf32>
        %cst_48 = arith.constant -5.000000e+00 : f32
        %cst_49 = arith.constant 5.000000e+00 : f32
        %140 = vector.broadcast %cst_48 : f32 to vector<1x1xf32>
        %141 = arith.maximumf %140, %135 : vector<1x1xf32>
        %142 = vector.broadcast %cst_49 : f32 to vector<1x1xf32>
        %143 = arith.minimumf %142, %141 : vector<1x1xf32>
        %cst_50 = arith.constant 2.000000e-02 : f32
        %144 = vector.broadcast %cst_50 : f32 to vector<1x1xf32>
        %145 = arith.mulf %144, %139 : vector<1x1xf32>
        %146 = arith.subf %arg6, %145 : vector<1x1xf32>
        %cst_51 = arith.constant 0.000000e+00 : f32
        %147 = vector.broadcast %cst_51 : f32 to vector<1x1xf32>
        %148 = arith.maximumf %146, %147 : vector<1x1xf32>
        %cst_52 = arith.constant 2.000000e-02 : f32
        %149 = vector.broadcast %cst_52 : f32 to vector<1x1xf32>
        %150 = arith.mulf %149, %143 : vector<1x1xf32>
        %151 = arith.subf %arg7, %150 : vector<1x1xf32>
        %152 = arith.maximumf %151, %43 : vector<1x1xf32>
        scf.yield %148, %152 : vector<1x1xf32>, vector<1x1xf32>
      }
      %cst_18 = arith.constant 1.000000e+00 : f32
      %49 = vector.broadcast %cst_18 : f32 to vector<1x1xf32>
      %50 = arith.addf %48#0, %49 : vector<1x1xf32>
      %cst_19 = arith.constant 3.000000e-01 : f32
      %51 = vector.broadcast %cst_19 : f32 to vector<1x1xf32>
      %52 = arith.mulf %48#0, %51 : vector<1x1xf32>
      %53 = arith.addf %52, %48#1 : vector<1x1xf32>
      %cst_20 = arith.constant 5.000000e-01 : f32
      %54 = vector.broadcast %cst_20 : f32 to vector<1x1xf32>
      %55 = arith.mulf %50, %54 : vector<1x1xf32>
      %cst_21 = arith.constant 1.69314718 : f32
      %56 = vector.broadcast %cst_21 : f32 to vector<1x1xf32>
      %57 = arith.mulf %55, %56 : vector<1x1xf32>
      %58 = arith.subf %53, %57 : vector<1x1xf32>
      %cst_22 = arith.constant 5.000000e-01 : f32
      %59 = vector.broadcast %cst_22 : f32 to vector<1x1xf32>
      %60 = arith.mulf %50, %59 : vector<1x1xf32>
      %61 = math.log %50 : vector<1x1xf32>
      %62 = arith.mulf %60, %61 : vector<1x1xf32>
      %63 = arith.addf %58, %62 : vector<1x1xf32>
      %64 = vector.broadcast %48#1 : vector<1x1xf32> to vector<1x128xf32>
      %65 = arith.subf %64, %35 : vector<1x128xf32>
      %66 = math.sqrt %65 : vector<1x128xf32>
      %67 = arith.mulf %33, %66 : vector<1x128xf32>
      %cst_23 = arith.constant dense<0.000000e+00> : vector<1xf32>
      %68 = vector.multi_reduction <add>, %67, %cst_23 [1] : vector<1x128xf32> to vector<1xf32>
      %69 = vector.shape_cast %68 : vector<1xf32> to vector<1x1xf32>
      %cst_24 = arith.constant dense<0.000000e+00> : vector<1xf32>
      %70 = vector.multi_reduction <add>, %69, %cst_24 [0] : vector<1x1xf32> to vector<1xf32>
      %71 = vector.shape_cast %70 : vector<1xf32> to vector<1x1xf32>
      %cst_25 = arith.constant 1.250000e-01 : f32
      %72 = vector.broadcast %cst_25 : f32 to vector<1x1xf32>
      %73 = arith.mulf %71, %72 : vector<1x1xf32>
      %cst_26 = arith.constant 1.000000e+00 : f32
      %74 = vector.broadcast %cst_26 : f32 to vector<1x1xf32>
      %75 = arith.divf %50, %74 : vector<1x1xf32>
      %76 = math.log %73 : vector<1x1xf32>
      %77 = arith.mulf %75, %76 : vector<1x1xf32>
      %78 = arith.subf %63, %77 : vector<1x1xf32>
      %79 = tpu.iota {dimensions = array<i32: 1>} : vector<1x128xi32>
      %c0_i32_27 = arith.constant 0 : i32
      %80 = vector.broadcast %c0_i32_27 : i32 to vector<1x128xi32>
      %81 = arith.cmpi eq, %79, %80 : vector<1x128xi32>
      %cst_28 = arith.constant 0.000000e+00 : f32
      %82 = vector.shape_cast %78 : vector<1x1xf32> to vector<1x1xf32>
      %83 = vector.broadcast %82 : vector<1x1xf32> to vector<1x128xf32>
      %84 = vector.broadcast %cst_28 : f32 to vector<1x128xf32>
      %85 = arith.select %81, %83, %84 : vector<1x128xi1>, vector<1x128xf32>
      %c1_i32_29 = arith.constant 1 : i32
      %86 = vector.broadcast %c1_i32_29 : i32 to vector<1x128xi32>
      %87 = arith.cmpi eq, %79, %86 : vector<1x128xi32>
      %88 = vector.shape_cast %48#0 : vector<1x1xf32> to vector<1x1xf32>
      %89 = vector.broadcast %88 : vector<1x1xf32> to vector<1x128xf32>
      %90 = arith.select %87, %89, %85 : vector<1x128xi1>, vector<1x128xf32>
      %c2_i32 = arith.constant 2 : i32
      %91 = vector.broadcast %c2_i32 : i32 to vector<1x128xi32>
      %92 = arith.cmpi eq, %79, %91 : vector<1x128xi32>
      %93 = vector.shape_cast %48#1 : vector<1x1xf32> to vector<1x1xf32>
      %94 = vector.broadcast %93 : vector<1x1xf32> to vector<1x128xf32>
      %95 = arith.select %92, %94, %90 : vector<1x128xi1>, vector<1x128xf32>
      %c0_30 = arith.constant 0 : index
      %c0_31 = arith.constant 0 : index
      %96 = vector.load %arg3[%c0_30, %c0_31] : memref<1x128xf32, #tpu.memory_space<vmem>>, vector<1x128xf32>
      tpu.vector_store %arg3[%c0_30, %c0_31], %95 {strides = array<i32>} : memref<1x128xf32, #tpu.memory_space<vmem>>, vector<1x128xf32>,
    } else {
    }
    return
  }
  func.func @transform_0(%arg0: i32) -> (i32, i32) {
    %c0_i32 = arith.constant 0 : i32
    %c0_i32_0 = arith.constant 0 : i32
    return %c0_i32, %arg0 : i32, i32
  }
  func.func @transform_1(%arg0: i32) -> (i32, i32) {
    %c0_i32 = arith.constant 0 : i32
    %c0_i32_0 = arith.constant 0 : i32
    return %c0_i32, %arg0 : i32, i32
  }
  func.func @transform_2(%arg0: i32) -> (i32, i32) {
    %c0_i32 = arith.constant 0 : i32
    %c0_i32_0 = arith.constant 0 : i32
    %c0_i32_1 = arith.constant 0 : i32
    return %c0_i32, %c0_i32_0 : i32, i32
  }
  func.func @transform_3(%arg0: i32) -> (i32, i32) {
    %c0_i32 = arith.constant 0 : i32
    %c0_i32_0 = arith.constant 0 : i32
    %c0_i32_1 = arith.constant 0 : i32
    return %c0_i32, %c0_i32_0 : i32, i32
  }
}

</mosaic_0001>

<llo_original>
// kernel: _armor_forward.1
$region0: #{_armor_forward.1}
  #allocation0 [shape = 'u32[]', space=smem, size = 0x4, offset = 0x4, fixed_abs, tag = 'smem constant byte address 0x4 - core index']
  #allocation1 [shape = 'u32[144,128]{1,0:T(1,128)}', space=vmem, size = 0x12000, scoped, tag = 'internal scratch']
  %s0 = inlined_call_operand.vmem [shape: f32[10,128], index: 0, kind: input, shape index: {}]
  %s1 = inlined_call_operand.vmem [shape: s32[1,128], index: 1, kind: input, shape index: {}]
  %s2 = inlined_call_operand.vmem [shape: f32[1,128], index: 2, kind: output, shape index: {0}]
  %s3 = inlined_call_operand.vmem [shape: f32[1,128], index: 3, kind: output, shape index: {1}]
  %4 = xla_tuple %s2, %s3
  %s5 = sld [smem:[#allocation0]]
  $region37: #{_armor_forward.1} parent=0
    _
  %s7 = ssub.s32 1, %s5
  %s8 = scalar_select 0, %s7, %s5
  // Predicated region
  $region2: #{_armor_forward.1} parent=0 // pred_check
    _
  $region3: #{_armor_forward.1} parent=0 // pred_check_branch
    %10 = sbr.rel (0) target = $region5
  $region4: #{_armor_forward.1} parent=0 // pred_region
    _
  $region5: #{_armor_forward.1} parent=0 // pred_fallthru
    _
  // Predicated region
  $region6: #{_armor_forward.1} parent=0 // pred_check
    _
  $region7: #{_armor_forward.1} parent=0 // pred_check_branch
    %12 = sbr.rel (0) target = $region9
  $region8: #{_armor_forward.1} parent=0 // pred_region
    _
  $region9: #{_armor_forward.1} parent=0 // pred_fallthru
    _
  %v13 = vld [vmem:[%s0] sm:$0xff]
  %v14 = vld [vmem:[%s0 + $0x8] sm:$0x3]
  %v15 = vld [vmem:[%s1] sm:$0x1]
  %vm16 = vcmask 1041408
  %v17 = vsel %vm16, %v14, -inf
  %v18 = vmax.f32 %v13, %v17
  %v19 = vrot.slane %v18, 4
  %v20 = vmax.f32 %v18, %v19
  %v21 = vrot.slane %v20, 2
  %v22 = vmax.f32 %v20, %v21
  %v23 = vrot.slane %v22, 1
  %v24 = vmax.f32 %v22, %v23
  %v25 = vsub.f32 %v13, %v24
  %v26 = vsub.f32 %v14, %v24
  %v27 = vmul.f32 %v25, 1.442695
  %v28 = vpow.pop %v27
  %v29 = vmul.f32 %v26, 1.442695
  %v30 = vpow.pop %v29
  %v31 = vsel %vm16, %v30, 0.0
  %v32 = vadd.f32 %v28, %v31
  %v33 = vrot.slane %v32, 4
  %v34 = vadd.f32 %v32, %v33
  %v35 = vrot.slane %v34, 2
  %v36 = vadd.f32 %v34, %v35
  %v37 = vrot.slane %v36, 1
  %v38 = vadd.f32 %v36, %v37
  %v39 = vlog2.pop %v38
  %v40 = vmul.f32 %v39, 0.6931472
  %v41 = vadd.f32 %v24, %v40
  %v42 = vlaneseq
  %v43 = vshrl.u32 %v42, 7
  %v44 = vadd.s32 %v43, 8
  %v45 = vlaneseq
  %v46 = vshrl.u32 %v45, 7
  %v47 = vsub.s32 0, %v46
  %v48 = vrot.slane %v15, %v47
  %vm49 = vcmp.eq.s32.totalorder %v43, %v48
  %vm50 = vcmp.eq.s32.totalorder %v44, %v48
  %v51 = vsel %vm49, %v13, 0.0
  %v52 = vsel %vm50, %v14, 0.0
  %v53 = vsel %vm16, %v52, 0.0
  %v54 = vadd.f32 %v51, %v53
  %v55 = vrot.slane %v54, 4
  %v56 = vadd.f32 %v54, %v55
  %v57 = vrot.slane %v56, 2
  %v58 = vadd.f32 %v56, %v57
  %v59 = vrot.slane %v58, 1
  %v60 = vadd.f32 %v58, %v59
  %v61 = vsub.f32 %v41, %v60
  %62 = vst [vmem:[%s3] sm:$0x1] %v61
  %p63 = scmp.eq.s32.totalorder 0, 0
  // Predicated region
  $region10: #{_armor_forward.1} parent=0 // pred_check
    %p64 = pneg %p63
  $region11: #{_armor_forward.1} parent=0 // pred_check_branch
    %66 = sbr.rel (%p64) target = $region13
  $region12: #{_armor_forward.1} parent=0 // pred_region
    %v67 = vld [vmem:[%s3] sm:$0x1]
    %v68 = vlaneseq
    %v69 = vand.u32 %v68, 127
    %v70 = vmul.u32 %v43, 128
    %v71 = vadd.s32 %v70, %v69
    %vm72 = vcmp.lt.s32.totalorder %v71, 8
    %v73 = vsel %vm72, 1, 0
    %v74 = vcvt.s32.f32 %v73
    %v75 = vsel %vm72, %v67, 0.0
    %v76 = vsel %vm72, %v67, -inf
    %vm77 = vcmask 1040384
    %v78 = vsel %vm77, %v76, -inf
    %79 = vmax.xlane.f32.xlu0 %v78
    %v80 = vpop.xlane.xlu0 %79
    %v81 = vadd.f32 %v80, 1e-06
    %v82 = vadd.f32 %v81, 1.0
    loop: start=0, step=1, limit=200
    $region14: #{_armor_forward.1} parent=12 // loop_pre_header
      _
    $region15: #{_armor_forward.1} parent=12 // loop_header
      %s84 = sphi 0, %s88
      %p85 = scmp.ge.s32.totalorder %s84, 200
      %v89 = vphi 0.0, %v132
      %v90 = vphi %v82, %v135
    $region16: #{_armor_forward.1} parent=12 // loop_header_branch
      %87 = sbr.rel (%p85) target = $region20
    $region17: #{_armor_forward.1} parent=12 // loop_body
      %v91 = vsub.f32 %v90, %v75
      %v92 = vrsqrt.pop %v91
      %v93 = vmul.f32 %v91, %v92
      %vm94 = vcmp.eq.f32.partialorder %v91, inf
      %v95 = vsel %vm94, %v91, %v93
      %vm96 = vcmp.eq.f32.partialorder %v91, 0.0
      %v97 = vand.u32 %v91, 2147483648
      %v98 = vsel %vm96, %v97, %v95
      %v99 = vmul.f32 %v74, %v98
      %v100 = vsel %vm77, %v99, 0.0
      %101 = vadd.xlane.f32.xlu0 %v100
      %v102 = vpop.xlane.xlu0 %101
      %v103 = vadd.f32 %v102, 0.0
      %v104 = vmul.f32 %v103, 0.125
      %v105 = vrsqrt.pop %v91
      %v106 = vmul.f32 %v74, %v105
      %v107 = vsel %vm77, %v106, 0.0
      %108 = vadd.xlane.f32.xlu0 %v107
      %v109 = vpop.xlane.xlu0 %108
      %v110 = vadd.f32 %v109, 0.0
      %v111 = vmul.f32 %v110, 0.125
      %v112 = vadd.f32 %v89, 1.0
      %v113 = vlog2.pop %v112
      %v114 = vmul.f32 %v113, 0.6931472
      %v115 = vadd.f32 %v114, 1.0
      %v116 = vmul.f32 %v115, 0.5
      %v117 = vadd.f32 %v116, -0.5465736
      %v118 = vlog2.pop %v104
      %v119 = vmul.f32 %v118, 0.6931472
      %v120 = vsub.f32 %v117, %v119
      %v121 = vmul.f32 %v112, 0.5
      %v122 = vmul.f32 %v121, %v111
      %v123 = vrcp.pop %v104
      %v124 = vmul.f32 %v122, %v123
      %v125 = vsub.f32 1.0, %v124
      %v126 = vmax.f32 %v120, -5.0
      %v127 = vmin.f32 %v126, 5.0
      %v128 = vmax.f32 %v125, -5.0
      %v129 = vmin.f32 %v128, 5.0
      %v130 = vmul.f32 %v127, 0.02
      %v131 = vsub.f32 %v89, %v130
      %v132 = vmax.f32 %v131, 0.0
      %v133 = vmul.f32 %v129, 0.02
      %v134 = vsub.f32 %v90, %v133
      %v135 = vmax.f32 %v134, %v81
    $region18: #{_armor_forward.1} parent=12 // loop_footer
      %s88 = sadd.s32 1, %s84
    $region19: #{_armor_forward.1} parent=12 // loop_footer_branch
      %83 = sbr.rel target = $region15
    $region20: #{_armor_forward.1} parent=12 // loop_exit
      _
    %v136 = vadd.f32 %v89, 1.0
    %v137 = vmul.f32 %v89, 0.3
    %v138 = vadd.f32 %v137, %v90
    %v139 = vmul.f32 %v136, 0.5
    %v140 = vmul.f32 %v139, 1.6931472
    %v141 = vsub.f32 %v138, %v140
    %v142 = vlog2.pop %v136
    %v143 = vmul.f32 %v142, 0.6931472
    %v144 = vmul.f32 %v139, %v143
    %v145 = vadd.f32 %v141, %v144
    %v146 = vsub.f32 %v90, %v75
    %v147 = vrsqrt.pop %v146
    %v148 = vmul.f32 %v146, %v147
    %vm149 = vcmp.eq.f32.partialorder %v146, inf
    %v150 = vsel %vm149, %v146, %v148
    %vm151 = vcmp.eq.f32.partialorder %v146, 0.0
    %v152 = vand.u32 %v146, 2147483648
    %v153 = vsel %vm151, %v152, %v150
    %v154 = vmul.f32 %v74, %v153
    %v155 = vsel %vm77, %v154, 0.0
    %156 = vadd.xlane.f32.xlu0 %v155
    %v157 = vpop.xlane.xlu0 %156
    %v158 = vadd.f32 %v157, 0.0
    %v159 = vmul.f32 %v158, 0.125
    %v160 = vlog2.pop %v159
    %v161 = vmul.f32 %v160, 0.6931472
    %v162 = vmul.f32 %v136, %v161
    %v163 = vsub.f32 %v145, %v162
    %vm164 = vcmp.eq.s32.totalorder %v69, 0
    %v165 = vsel %vm164, %v163, 0.0
    %vm166 = vcmp.eq.s32.totalorder %v69, 1
    %v167 = vsel %vm166, %v89, %v165
    %vm168 = vcmp.eq.s32.totalorder %v69, 2
    %v169 = vsel %vm168, %v90, %v167
    %170 = vst [vmem:[%s2] sm:$0x1] %v169
  $region13: #{_armor_forward.1} parent=0 // pred_fallthru
    _
  // Predicated region
  $region21: #{_armor_forward.1} parent=0 // pred_check
    _
  $region22: #{_armor_forward.1} parent=0 // pred_check_branch
    %172 = sbr.rel (0) target = $region24
  $region23: #{_armor_forward.1} parent=0 // pred_region
    _
  $region24: #{_armor_forward.1} parent=0 // pred_fallthru
    _
  // Predicated region
  $region25: #{_armor_forward.1} parent=0 // pred_check
    _
  $region26: #{_armor_forward.1} parent=0 // pred_check_branch
    %174 = sbr.rel (0) target = $region28
  $region27: #{_armor_forward.1} parent=0 // pred_region
    _
  $region28: #{_armor_forward.1} parent=0 // pred_fallthru
    _
  // Predicated region
  $region29: #{_armor_forward.1} parent=0 // pred_check
    _
  $region30: #{_armor_forward.1} parent=0 // pred_check_branch
    %176 = sbr.rel (0) target = $region32
  $region31: #{_armor_forward.1} parent=0 // pred_region
    _
  $region32: #{_armor_forward.1} parent=0 // pred_fallthru
    _
  // Predicated region
  $region33: #{_armor_forward.1} parent=0 // pred_check
    _
  $region34: #{_armor_forward.1} parent=0 // pred_check_branch
    %178 = sbr.rel (0) target = $region36
  $region35: #{_armor_forward.1} parent=0 // pred_region
    _
  $region36: #{_armor_forward.1} parent=0 // pred_fallthru
    _

</llo_original>
